<compile_context>
chip_gen: v7x
topology: tpu7x:2x2x1
jax: 0.10.0
libtpu: 0.0.40
codegen_flags: <defaults>
</compile_context>

<pallas_src>
import jax
import jax.numpy as jnp
from jax import lax
from jax.experimental import pallas as pl
from jax.experimental.pallas import tpu as pltpu

# ---- problem constants (from the PyTorch module) ----------------------------
CIN1, COUT1 = 2, 4          # ConvTranspose2d(2, 4, (2,3), stride=(2,1), padding=(21,17))
KH, KW = 2, 3
SH, SW = 2, 1
PH, PW = 21, 17
CIN2, COUT2 = COUT1, 2      # ConvTranspose2d(4, 2, 1)   (in_channels fixed, see TODO)

# Polyphase row mapping, derived from  i = SH*ih - PH + kh  with SH=2, PH odd:
#   even output row i=2r   -> kh = 1, ih = r + (PH-1)//2
#   odd  output row i=2r+1 -> kh = 0, ih = r + (PH+1)//2
R0 = ((PH - 1) // 2, (PH + 1) // 2)     # input-row offset per output-row parity
KH_OF_P = (1, 0)                        # kernel row tap per output-row parity
# Column tap: output col j reads input col j + PW - kw, always in range (PW >= KW-1).


def _fused_kernel(b1_ref, w2_ref, b2_ref, xp_ref, w1_ref, o_ref):
    """
    b1_ref : SMEM (COUT1,)           deconv bias
    w2_ref : SMEM (CIN2*COUT2,)      1x1 weights, [in, out] order
    b2_ref : SMEM (COUT2,)           1x1 bias
    xp_ref : VMEM (KW, R, L)         pre-shifted windows, lanes = [ic0p0|ic0p1|ic1p0|ic1p1],
                                     R = N*hr_pad, L = 4*wout
    w1_ref : VMEM (COUT1*KW, 1, L)   per-lane deconv weight rows (same lane-group layout)
    o_ref  : VMEM (R, L)             lanes = [c0p0 | c0p1 | c1p0 | c1p1]
    """
    R, L = o_ref.shape
    half = L // 2

    # ---- hoisted scalar reads (each used exactly once) -----------------------
    b1s = [b1_ref[c] for c in range(COUT1)]
    b2s = [b2_ref[c] for c in range(COUT2)]
    w2s = [[w2_ref[c1 * COUT2 + c2] for c2 in range(COUT2)] for c1 in range(CIN2)]

    # ---- the KW tap slabs, loaded once (offset-0, fully dense) ---------------
    taps = [xp_ref[kw] for kw in range(KW)]

    # ---- polyphase deconv + ReLU + fused 1x1 mix ------------------------------
    acc = [None] * COUT2
    for oc in range(COUT1):
        t = taps[0] * w1_ref[oc * KW + 0]
        for kw in range(1, KW):
            t = t + taps[kw] * w1_ref[oc * KW + kw]
        # Reduce across the two input-channel lane groups (XLU roll, off the VPU
        # critical path).  Result is duplicated in both halves of the lane axis.
        t = t + pltpu.roll(t, shift=half, axis=1)
        y = jnp.maximum(t + b1s[oc], 0.0)                     # bias + ReLU
        for oc2 in range(COUT2):
            c = y * w2s[oc][oc2]
            acc[oc2] = c if acc[oc2] is None else acc[oc2] + c

    # ---- assemble [c0(p0|p1) | c1(p0|p1)] with one lane-select, one dense store
    lane = lax.broadcasted_iota(jnp.int32, (R, L), 1)
    o_ref[...] = jnp.where(lane < half, acc[0] + b2s[0], acc[1] + b2s[1])


def model_forward(x, w1, b1, w2, b2):
    """x: (N, CIN1, H, W) float32. Returns (N, COUT2, Hout, Wout)."""
    n, cin, h, w = x.shape
    assert cin == CIN1
    hout = (h - 1) * SH - 2 * PH + KH
    wout = (w - 1) * SW - 2 * PW + KW
    assert hout > 0 and wout > 0, "spatial dims too small for padding (21, 17)"
    hr = hout // 2                      # hout is always even (hout = 2H - 42)
    hr_pad = ((hr + 7) // 8) * 8        # pad rows -> unmasked sublane stores
    L = 2 * CIN1 * wout                 # lanes = [ic0p0 | ic0p1 | ic1p0 | ic1p1]
    rows = n * hr_pad

    x = x.astype(jnp.float32)

    # --- layout plumbing in XLA: pre-window / pre-shift the KW taps so the
    #     kernel only ever touches offset-0, lane-dense operands. ---------------
    per_kw = []
    for kw in range(KW):
        groups = []
        for ic in range(CIN1):
            for p in range(2):
                groups.append(x[:, ic, R0[p]:R0[p] + hr, PW - kw:PW - kw + wout])
        g = jnp.stack(groups, axis=2).reshape(n, hr, L)          # (N, hr, L)
        g = jnp.pad(g, ((0, 0), (0, hr_pad - hr), (0, 0)))       # rows -> hr_pad
        per_kw.append(g.reshape(rows, L))
    xp = jnp.stack(per_kw, axis=0)                               # (KW, rows, L)

    # --- per-lane deconv weight rows: w1[ic, oc, KH_OF_P[p], kw] on lane group (ic,p)
    wsel = jnp.stack([w1[:, :, KH_OF_P[0], :],
                      w1[:, :, KH_OF_P[1], :]], axis=1)          # (CIN1, 2, COUT1, KW)
    wsel = jnp.transpose(wsel, (2, 3, 0, 1)).reshape(COUT1, KW, CIN1 * 2)
    w1rows = jnp.repeat(wsel[..., None], wout, axis=-1)          # (COUT1, KW, 4, wout)
    w1rows = w1rows.reshape(COUT1 * KW, 1, L).astype(jnp.float32)

    smem = pl.BlockSpec(memory_space=pltpu.MemorySpace.SMEM)
    vmem = pl.BlockSpec(memory_space=pltpu.MemorySpace.VMEM)
    packed = pl.pallas_call(
        _fused_kernel,
        out_shape=jax.ShapeDtypeStruct((rows, L), jnp.float32),
        in_specs=[smem, smem, smem, vmem, vmem],
        out_specs=vmem,
    )(b1.astype(jnp.float32),
      w2.reshape(CIN2 * COUT2).astype(jnp.float32),
      b2.astype(jnp.float32),
      xp, w1rows)

    # --- un-pack lanes [c2, p, j] and interleave rows (i = 2r + p) -------------
    out = packed.reshape(n, hr_pad, L)[:, :hr, :]
    out = out.reshape(n, hr, COUT2, 2, wout)
    out = jnp.transpose(out, (0, 2, 1, 3, 4)).reshape(n, COUT2, hout, wout)
    return out


def reference_forward(x, w1, b1, w2, b2):
    """Pure-JAX reference of ConvTranspose2d -> ReLU -> ConvTranspose2d(1x1)."""
    rhs1 = jnp.transpose(jnp.flip(w1, (2, 3)), (1, 0, 2, 3))        # OIHW
    y_full = lax.conv_general_dilated(
        x, rhs1, window_strides=(1, 1),
        padding=[(KH - 1, KH - 1), (KW - 1, KW - 1)],
        lhs_dilation=(SH, SW),
        dimension_numbers=("NCHW", "OIHW", "NCHW"))
    hout = (x.shape[2] - 1) * SH - 2 * PH + KH
    wout = (x.shape[3] - 1) * SW - 2 * PW + KW
    y1 = y_full[:, :, PH:PH + hout, PW:PW + wout] + b1[None, :, None, None]
    y1 = jnp.maximum(y1, 0.0)
    rhs2 = jnp.transpose(w2, (1, 0, 2, 3))                          # OIHW (1x1)
    y2 = lax.conv_general_dilated(
        y1, rhs2, window_strides=(1, 1), padding=[(0, 0), (0, 0)],
        dimension_numbers=("NCHW", "OIHW", "NCHW"))
    return y2 + b2[None, :, None, None]


if __name__ == "__main__":
    key = jax.random.PRNGKey(0)
    kx, k1, k2, k3, k4 = jax.random.split(key, 5)

    # Small shapes consistent with the module (padding 21/17 requires H>=22, W>=33).
    N, H, W = 2, 32, 64
    x = jax.random.normal(kx, (N, CIN1, H, W), jnp.float32)

    w1 = 0.1 * jax.random.normal(k1, (CIN1, COUT1, KH, KW), jnp.float32)
    b1 = 0.1 * jax.random.normal(k2, (COUT1,), jnp.float32)
    w2 = 0.1 * jax.random.normal(k3, (CIN2, COUT2, 1, 1), jnp.float32)
    b2 = 0.1 * jax.random.normal(k4, (COUT2,), jnp.float32)

    out = jax.block_until_ready(jax.jit(model_forward)(x, w1, b1, w2, b2))
    ref = jax.block_until_ready(reference_forward(x, w1, b1, w2, b2))

    assert out.shape == ref.shape, (out.shape, ref.shape)
    assert jnp.allclose(out, ref, atol=1e-4, rtol=1e-4), float(
        jnp.max(jnp.abs(out - ref)))

    print("KERNEL_OK")
</pallas_src>

<mosaic_0001>
module attributes {stable_mosaic.version = 11 : i64} {
  func.func @_fused_kernel(%arg0: memref<4xf32, #tpu.memory_space<smem>>, %arg1: memref<8xf32, #tpu.memory_space<smem>>, %arg2: memref<2xf32, #tpu.memory_space<smem>>, %arg3: memref<3x32x128xf32, #tpu.memory_space<vmem>>, %arg4: memref<12x1x128xf32, #tpu.memory_space<vmem>>, %arg5: memref<32x128xf32, #tpu.memory_space<vmem>>) attributes {dimension_semantics = [], scalar_prefetch = 0 : i64, scratch_operands = 0 : i64, tpu.core_type = #tpu.core_type<tc>} {
    %c0 = arith.constant 0 : index
    %0 = memref.load %arg0[%c0] : memref<4xf32, #tpu.memory_space<smem>>
    %c1 = arith.constant 1 : index
    %1 = memref.load %arg0[%c1] : memref<4xf32, #tpu.memory_space<smem>>
    %c2 = arith.constant 2 : index
    %2 = memref.load %arg0[%c2] : memref<4xf32, #tpu.memory_space<smem>>
    %c3 = arith.constant 3 : index
    %3 = memref.load %arg0[%c3] : memref<4xf32, #tpu.memory_space<smem>>
    %c0_0 = arith.constant 0 : index
    %4 = memref.load %arg2[%c0_0] : memref<2xf32, #tpu.memory_space<smem>>
    %c1_1 = arith.constant 1 : index
    %5 = memref.load %arg2[%c1_1] : memref<2xf32, #tpu.memory_space<smem>>
    %c0_2 = arith.constant 0 : index
    %6 = memref.load %arg1[%c0_2] : memref<8xf32, #tpu.memory_space<smem>>
    %c1_3 = arith.constant 1 : index
    %7 = memref.load %arg1[%c1_3] : memref<8xf32, #tpu.memory_space<smem>>
    %c2_4 = arith.constant 2 : index
    %8 = memref.load %arg1[%c2_4] : memref<8xf32, #tpu.memory_space<smem>>
    %c3_5 = arith.constant 3 : index
    %9 = memref.load %arg1[%c3_5] : memref<8xf32, #tpu.memory_space<smem>>
    %c4 = arith.constant 4 : index
    %10 = memref.load %arg1[%c4] : memref<8xf32, #tpu.memory_space<smem>>
    %c5 = arith.constant 5 : index
    %11 = memref.load %arg1[%c5] : memref<8xf32, #tpu.memory_space<smem>>
    %c6 = arith.constant 6 : index
    %12 = memref.load %arg1[%c6] : memref<8xf32, #tpu.memory_space<smem>>
    %c7 = arith.constant 7 : index
    %13 = memref.load %arg1[%c7] : memref<8xf32, #tpu.memory_space<smem>>
    %c0_6 = arith.constant 0 : index
    %c0_7 = arith.constant 0 : index
    %c0_8 = arith.constant 0 : index
    %14 = vector.load %arg3[%c0_6, %c0_7, %c0_8] : memref<3x32x128xf32, #tpu.memory_space<vmem>>, vector<1x32x128xf32>
    %15 = vector.shape_cast %14 : vector<1x32x128xf32> to vector<32x128xf32>
    %c1_9 = arith.constant 1 : index
    %c0_10 = arith.constant 0 : index
    %c0_11 = arith.constant 0 : index
    %16 = vector.load %arg3[%c1_9, %c0_10, %c0_11] : memref<3x32x128xf32, #tpu.memory_space<vmem>>, vector<1x32x128xf32>
    %17 = vector.shape_cast %16 : vector<1x32x128xf32> to vector<32x128xf32>
    %c2_12 = arith.constant 2 : index
    %c0_13 = arith.constant 0 : index
    %c0_14 = arith.constant 0 : index
    %18 = vector.load %arg3[%c2_12, %c0_13, %c0_14] : memref<3x32x128xf32, #tpu.memory_space<vmem>>, vector<1x32x128xf32>
    %19 = vector.shape_cast %18 : vector<1x32x128xf32> to vector<32x128xf32>
    %c0_15 = arith.constant 0 : index
    %c0_16 = arith.constant 0 : index
    %c0_17 = arith.constant 0 : index
    %20 = vector.load %arg4[%c0_15, %c0_16, %c0_17] : memref<12x1x128xf32, #tpu.memory_space<vmem>>, vector<1x1x128xf32>
    %21 = vector.shape_cast %20 : vector<1x1x128xf32> to vector<1x128xf32>
    %22 = vector.broadcast %21 : vector<1x128xf32> to vector<32x128xf32>
    %23 = arith.mulf %15, %22 : vector<32x128xf32>
    %c1_18 = arith.constant 1 : index
    %c0_19 = arith.constant 0 : index
    %c0_20 = arith.constant 0 : index
    %24 = vector.load %arg4[%c1_18, %c0_19, %c0_20] : memref<12x1x128xf32, #tpu.memory_space<vmem>>, vector<1x1x128xf32>
    %25 = vector.shape_cast %24 : vector<1x1x128xf32> to vector<1x128xf32>
    %26 = vector.broadcast %25 : vector<1x128xf32> to vector<32x128xf32>
    %27 = arith.mulf %17, %26 : vector<32x128xf32>
    %28 = arith.addf %23, %27 : vector<32x128xf32>
    %c2_21 = arith.constant 2 : index
    %c0_22 = arith.constant 0 : index
    %c0_23 = arith.constant 0 : index
    %29 = vector.load %arg4[%c2_21, %c0_22, %c0_23] : memref<12x1x128xf32, #tpu.memory_space<vmem>>, vector<1x1x128xf32>
    %30 = vector.shape_cast %29 : vector<1x1x128xf32> to vector<1x128xf32>
    %31 = vector.broadcast %30 : vector<1x128xf32> to vector<32x128xf32>
    %32 = arith.mulf %19, %31 : vector<32x128xf32>
    %33 = arith.addf %28, %32 : vector<32x128xf32>
    %c64_i32 = arith.constant 64 : i32
    %34 = tpu.dynamic_rotate %33 by %c64_i32 dim 1 : vector<32x128xf32>, i32 -> vector<32x128xf32>
    %35 = arith.addf %33, %34 : vector<32x128xf32>
    %36 = vector.broadcast %0 : f32 to vector<32x128xf32>
    %37 = arith.addf %35, %36 : vector<32x128xf32>
    %cst = arith.constant 0.000000e+00 : f32
    %38 = vector.broadcast %cst : f32 to vector<32x128xf32>
    %39 = arith.maximumf %37, %38 : vector<32x128xf32>
    %40 = vector.broadcast %6 : f32 to vector<32x128xf32>
    %41 = arith.mulf %39, %40 : vector<32x128xf32>
    %42 = vector.broadcast %7 : f32 to vector<32x128xf32>
    %43 = arith.mulf %39, %42 : vector<32x128xf32>
    %c3_24 = arith.constant 3 : index
    %c0_25 = arith.constant 0 : index
    %c0_26 = arith.constant 0 : index
    %44 = vector.load %arg4[%c3_24, %c0_25, %c0_26] : memref<12x1x128xf32, #tpu.memory_space<vmem>>, vector<1x1x128xf32>
    %45 = vector.shape_cast %44 : vector<1x1x128xf32> to vector<1x128xf32>
    %46 = vector.broadcast %45 : vector<1x128xf32> to vector<32x128xf32>
    %47 = arith.mulf %15, %46 : vector<32x128xf32>
    %c4_27 = arith.constant 4 : index
    %c0_28 = arith.constant 0 : index
    %c0_29 = arith.constant 0 : index
    %48 = vector.load %arg4[%c4_27, %c0_28, %c0_29] : memref<12x1x128xf32, #tpu.memory_space<vmem>>, vector<1x1x128xf32>
    %49 = vector.shape_cast %48 : vector<1x1x128xf32> to vector<1x128xf32>
    %50 = vector.broadcast %49 : vector<1x128xf32> to vector<32x128xf32>
    %51 = arith.mulf %17, %50 : vector<32x128xf32>
    %52 = arith.addf %47, %51 : vector<32x128xf32>
    %c5_30 = arith.constant 5 : index
    %c0_31 = arith.constant 0 : index
    %c0_32 = arith.constant 0 : index
    %53 = vector.load %arg4[%c5_30, %c0_31, %c0_32] : memref<12x1x128xf32, #tpu.memory_space<vmem>>, vector<1x1x128xf32>
    %54 = vector.shape_cast %53 : vector<1x1x128xf32> to vector<1x128xf32>
    %55 = vector.broadcast %54 : vector<1x128xf32> to vector<32x128xf32>
    %56 = arith.mulf %19, %55 : vector<32x128xf32>
    %57 = arith.addf %52, %56 : vector<32x128xf32>
    %c64_i32_33 = arith.constant 64 : i32
    %58 = tpu.dynamic_rotate %57 by %c64_i32_33 dim 1 : vector<32x128xf32>, i32 -> vector<32x128xf32>
    %59 = arith.addf %57, %58 : vector<32x128xf32>
    %60 = vector.broadcast %1 : f32 to vector<32x128xf32>
    %61 = arith.addf %59, %60 : vector<32x128xf32>
    %cst_34 = arith.constant 0.000000e+00 : f32
    %62 = vector.broadcast %cst_34 : f32 to vector<32x128xf32>
    %63 = arith.maximumf %61, %62 : vector<32x128xf32>
    %64 = vector.broadcast %8 : f32 to vector<32x128xf32>
    %65 = arith.mulf %63, %64 : vector<32x128xf32>
    %66 = arith.addf %41, %65 : vector<32x128xf32>
    %67 = vector.broadcast %9 : f32 to vector<32x128xf32>
    %68 = arith.mulf %63, %67 : vector<32x128xf32>
    %69 = arith.addf %43, %68 : vector<32x128xf32>
    %c6_35 = arith.constant 6 : index
    %c0_36 = arith.constant 0 : index
    %c0_37 = arith.constant 0 : index
    %70 = vector.load %arg4[%c6_35, %c0_36, %c0_37] : memref<12x1x128xf32, #tpu.memory_space<vmem>>, vector<1x1x128xf32>
    %71 = vector.shape_cast %70 : vector<1x1x128xf32> to vector<1x128xf32>
    %72 = vector.broadcast %71 : vector<1x128xf32> to vector<32x128xf32>
    %73 = arith.mulf %15, %72 : vector<32x128xf32>
    %c7_38 = arith.constant 7 : index
    %c0_39 = arith.constant 0 : index
    %c0_40 = arith.constant 0 : index
    %74 = vector.load %arg4[%c7_38, %c0_39, %c0_40] : memref<12x1x128xf32, #tpu.memory_space<vmem>>, vector<1x1x128xf32>
    %75 = vector.shape_cast %74 : vector<1x1x128xf32> to vector<1x128xf32>
    %76 = vector.broadcast %75 : vector<1x128xf32> to vector<32x128xf32>
    %77 = arith.mulf %17, %76 : vector<32x128xf32>
    %78 = arith.addf %73, %77 : vector<32x128xf32>
    %c8 = arith.constant 8 : index
    %c0_41 = arith.constant 0 : index
    %c0_42 = arith.constant 0 : index
    %79 = vector.load %arg4[%c8, %c0_41, %c0_42] : memref<12x1x128xf32, #tpu.memory_space<vmem>>, vector<1x1x128xf32>
    %80 = vector.shape_cast %79 : vector<1x1x128xf32> to vector<1x128xf32>
    %81 = vector.broadcast %80 : vector<1x128xf32> to vector<32x128xf32>
    %82 = arith.mulf %19, %81 : vector<32x128xf32>
    %83 = arith.addf %78, %82 : vector<32x128xf32>
    %c64_i32_43 = arith.constant 64 : i32
    %84 = tpu.dynamic_rotate %83 by %c64_i32_43 dim 1 : vector<32x128xf32>, i32 -> vector<32x128xf32>
    %85 = arith.addf %83, %84 : vector<32x128xf32>
    %86 = vector.broadcast %2 : f32 to vector<32x128xf32>
    %87 = arith.addf %85, %86 : vector<32x128xf32>
    %cst_44 = arith.constant 0.000000e+00 : f32
    %88 = vector.broadcast %cst_44 : f32 to vector<32x128xf32>
    %89 = arith.maximumf %87, %88 : vector<32x128xf32>
    %90 = vector.broadcast %10 : f32 to vector<32x128xf32>
    %91 = arith.mulf %89, %90 : vector<32x128xf32>
    %92 = arith.addf %66, %91 : vector<32x128xf32>
    %93 = vector.broadcast %11 : f32 to vector<32x128xf32>
    %94 = arith.mulf %89, %93 : vector<32x128xf32>
    %95 = arith.addf %69, %94 : vector<32x128xf32>
    %c9 = arith.constant 9 : index
    %c0_45 = arith.constant 0 : index
    %c0_46 = arith.constant 0 : index
    %96 = vector.load %arg4[%c9, %c0_45, %c0_46] : memref<12x1x128xf32, #tpu.memory_space<vmem>>, vector<1x1x128xf32>
    %97 = vector.shape_cast %96 : vector<1x1x128xf32> to vector<1x128xf32>
    %98 = vector.broadcast %97 : vector<1x128xf32> to vector<32x128xf32>
    %99 = arith.mulf %15, %98 : vector<32x128xf32>
    %c10 = arith.constant 10 : index
    %c0_47 = arith.constant 0 : index
    %c0_48 = arith.constant 0 : index
    %100 = vector.load %arg4[%c10, %c0_47, %c0_48] : memref<12x1x128xf32, #tpu.memory_space<vmem>>, vector<1x1x128xf32>
    %101 = vector.shape_cast %100 : vector<1x1x128xf32> to vector<1x128xf32>
    %102 = vector.broadcast %101 : vector<1x128xf32> to vector<32x128xf32>
    %103 = arith.mulf %17, %102 : vector<32x128xf32>
    %104 = arith.addf %99, %103 : vector<32x128xf32>
    %c11 = arith.constant 11 : index
    %c0_49 = arith.constant 0 : index
    %c0_50 = arith.constant 0 : index
    %105 = vector.load %arg4[%c11, %c0_49, %c0_50] : memref<12x1x128xf32, #tpu.memory_space<vmem>>, vector<1x1x128xf32>
    %106 = vector.shape_cast %105 : vector<1x1x128xf32> to vector<1x128xf32>
    %107 = vector.broadcast %106 : vector<1x128xf32> to vector<32x128xf32>
    %108 = arith.mulf %19, %107 : vector<32x128xf32>
    %109 = arith.addf %104, %108 : vector<32x128xf32>
    %c64_i32_51 = arith.constant 64 : i32
    %110 = tpu.dynamic_rotate %109 by %c64_i32_51 dim 1 : vector<32x128xf32>, i32 -> vector<32x128xf32>
    %111 = arith.addf %109, %110 : vector<32x128xf32>
    %112 = vector.broadcast %3 : f32 to vector<32x128xf32>
    %113 = arith.addf %111, %112 : vector<32x128xf32>
    %cst_52 = arith.constant 0.000000e+00 : f32
    %114 = vector.broadcast %cst_52 : f32 to vector<32x128xf32>
    %115 = arith.maximumf %113, %114 : vector<32x128xf32>
    %116 = vector.broadcast %12 : f32 to vector<32x128xf32>
    %117 = arith.mulf %115, %116 : vector<32x128xf32>
    %118 = arith.addf %92, %117 : vector<32x128xf32>
    %119 = vector.broadcast %13 : f32 to vector<32x128xf32>
    %120 = arith.mulf %115, %119 : vector<32x128xf32>
    %121 = arith.addf %95, %120 : vector<32x128xf32>
    %122 = tpu.iota {dimensions = array<i32: 1>} : vector<32x128xi32>
    %c64_i32_53 = arith.constant 64 : i32
    %123 = vector.broadcast %c64_i32_53 : i32 to vector<32x128xi32>
    %124 = arith.cmpi slt, %122, %123 : vector<32x128xi32>
    %125 = vector.broadcast %4 : f32 to vector<32x128xf32>
    %126 = arith.addf %118, %125 : vector<32x128xf32>
    %127 = vector.broadcast %5 : f32 to vector<32x128xf32>
    %128 = arith.addf %121, %127 : vector<32x128xf32>
    %129 = arith.select %124, %126, %128 : vector<32x128xi1>, vector<32x128xf32>
    %c0_54 = arith.constant 0 : index
    %c0_55 = arith.constant 0 : index
    %130 = vector.load %arg5[%c0_54, %c0_55] : memref<32x128xf32, #tpu.memory_space<vmem>>, vector<32x128xf32>
    tpu.vector_store %arg5[%c0_54, %c0_55], %129 {strides = array<i32>} : memref<32x128xf32, #tpu.memory_space<vmem>>, vector<32x128xf32>,
    return
  }
}

</mosaic_0001>

<llo_original>
// kernel: model_forward.1
$region0: #{model_forward.1}
  #allocation0 [shape = 'u32[]', space=smem, size = 0x4, offset = 0x4, fixed_abs, tag = 'smem constant byte address 0x4 - core index']
  #allocation1 [shape = 'u32[144,128]{1,0:T(1,128)}', space=vmem, size = 0x12000, scoped, tag = 'internal scratch']
  %s0 = inlined_call_operand.vmem [shape: f32[4], index: 0, kind: input, shape index: {}]
  %s1 = inlined_call_operand.vmem [shape: f32[8], index: 1, kind: input, shape index: {}]
  %s2 = inlined_call_operand.vmem [shape: f32[2], index: 2, kind: input, shape index: {}]
  %s3 = inlined_call_operand.vmem [shape: f32[3,32,128], index: 3, kind: input, shape index: {}]
  %s4 = inlined_call_operand.vmem [shape: f32[12,1,128], index: 4, kind: input, shape index: {}]
  %s5 = inlined_call_operand.vmem [shape: f32[32,128], index: 5, kind: output, shape index: {}]
  %s6 = sld [smem:[#allocation0]]
  $region42: #{model_forward.1} parent=0
    _
  %s8 = ssub.s32 1, %s6
  %s9 = scalar_select 0, %s8, %s6
  $region1: #{model_forward.1} parent=0
    #allocation2 [shape = 'u8[512]{0}', space=smem, size = 0x200, scoped, tag = 'input window, operand 0, single buffered']
    #allocation3 [shape = 's32[1]{0}', space=sflag, size = 0x4, scoped, tag = 'scoped memory for model_forward.1']
    #allocation4 [shape = 'u8[512]{0}', space=smem, size = 0x200, scoped, tag = 'input window, operand 1, single buffered']
    #allocation5 [shape = 's32[1]{0}', space=sflag, size = 0x4, scoped, tag = 'scoped memory for model_forward.1']
    #allocation6 [shape = 'u8[512]{0}', space=smem, size = 0x200, scoped, tag = 'input window, operand 2, single buffered']
    %10 = vsyncpa [#allocation3], 0
    %11 = vsyncpa [#allocation5], 0
    // Predicated region
    $region2: #{model_forward.1} parent=1 // pred_check
      _
    $region3: #{model_forward.1} parent=1 // pred_check_branch
      %13 = sbr.rel (0) target = $region5
    $region4: #{model_forward.1} parent=1 // pred_region
      %s15 = ssub.s32 16, 16
      %16 = vsyncadd [#allocation3], %s15
      %s18 = sshll.u32 %s0, 4
      %s19 = int_to_ptr.vmem [resolvable:$true] %s18
      %21 = dma.vmem_to_smem %s19, 16, [#allocation2], [#allocation3]
    $region5: #{model_forward.1} parent=1 // pred_fallthru
      _
    // Predicated region
    $region6: #{model_forward.1} parent=1 // pred_check
      _
    $region7: #{model_forward.1} parent=1 // pred_check_branch
      %23 = sbr.rel (0) target = $region9
    $region8: #{model_forward.1} parent=1 // pred_region
      %s25 = ssub.s32 16, 16
      %26 = vsyncadd [#allocation5], %s25
      %s28 = sshll.u32 %s1, 4
      %s29 = int_to_ptr.vmem [resolvable:$true] %s28
      %31 = dma.vmem_to_smem %s29, 16, [#allocation4], [#allocation5]
    $region9: #{model_forward.1} parent=1 // pred_fallthru
      _
    // Predicated region
    $region10: #{model_forward.1} parent=1 // pred_check
      _
    $region11: #{model_forward.1} parent=1 // pred_check_branch
      %33 = sbr.rel (0) target = $region13
    $region12: #{model_forward.1} parent=1 // pred_region
      %s35 = ssub.s32 16, 16
      %36 = vsyncadd [#allocation5], %s35
      %s38 = sshll.u32 %s2, 4
      %s39 = int_to_ptr.vmem [resolvable:$true] %s38
      %41 = dma.vmem_to_smem %s39, 16, [#allocation6], [#allocation5]
    $region13: #{model_forward.1} parent=1 // pred_fallthru
      _
    // Predicated region
    $region14: #{model_forward.1} parent=1 // pred_check
      _
    $region15: #{model_forward.1} parent=1 // pred_check_branch
      %43 = sbr.rel (0) target = $region17
    $region16: #{model_forward.1} parent=1 // pred_region
      _
    $region17: #{model_forward.1} parent=1 // pred_fallthru
      _
    // Predicated region
    $region18: #{model_forward.1} parent=1 // pred_check
      _
    $region19: #{model_forward.1} parent=1 // pred_check_branch
      %45 = sbr.rel (0) target = $region21
    $region20: #{model_forward.1} parent=1 // pred_region
      _
    $region21: #{model_forward.1} parent=1 // pred_fallthru
      _
    // Predicated region
    $region22: #{model_forward.1} parent=1 // pred_check
      _
    $region23: #{model_forward.1} parent=1 // pred_check_branch
      %47 = sbr.rel (0) target = $region25
    $region24: #{model_forward.1} parent=1 // pred_region
      %48 = dma.done [#allocation3], 16
    $region25: #{model_forward.1} parent=1 // pred_fallthru
      _
    // Predicated region
    $region26: #{model_forward.1} parent=1 // pred_check
      _
    $region27: #{model_forward.1} parent=1 // pred_check_branch
      %50 = sbr.rel (0) target = $region29
    $region28: #{model_forward.1} parent=1 // pred_region
      %51 = dma.done [#allocation5], 16
    $region29: #{model_forward.1} parent=1 // pred_fallthru
      _
    // Predicated region
    $region30: #{model_forward.1} parent=1 // pred_check
      _
    $region31: #{model_forward.1} parent=1 // pred_check_branch
      %53 = sbr.rel (0) target = $region33
    $region32: #{model_forward.1} parent=1 // pred_region
      %54 = dma.done [#allocation5], 16
    $region33: #{model_forward.1} parent=1 // pred_fallthru
      _
    %55 = sfence
    %s56 = sld [smem:[#allocation2]]
    %s57 = sld [smem:[#allocation2 + $0x1]]
    %s58 = sld [smem:[#allocation2 + $0x2]]
    %s59 = sld [smem:[#allocation2 + $0x3]]
    %s60 = sld [smem:[#allocation6]]
    %s61 = sld [smem:[#allocation6 + $0x1]]
    %s62 = sld [smem:[#allocation4]]
    %s63 = sld [smem:[#allocation4 + $0x1]]
    %s64 = sld [smem:[#allocation4 + $0x2]]
    %s65 = sld [smem:[#allocation4 + $0x3]]
    %s66 = sld [smem:[#allocation4 + $0x4]]
    %s67 = sld [smem:[#allocation4 + $0x5]]
    %s68 = sld [smem:[#allocation4 + $0x6]]
    %s69 = sld [smem:[#allocation4 + $0x7]]
    %v70 = vld [vmem:[%s3] sm:$0xff]
    %v71 = vld [vmem:[%s3 + $0x8] sm:$0xff]
    %v72 = vld [vmem:[%s3 + $0x10] sm:$0xff]
    %v73 = vld [vmem:[%s3 + $0x18] sm:$0xff]
    %s74 = scalar_lea.vmem %s3, 32
    %v75 = vld [vmem:[%s74] sm:$0xff]
    %v76 = vld [vmem:[%s74 + $0x8] sm:$0xff]
    %v77 = vld [vmem:[%s74 + $0x10] sm:$0xff]
    %v78 = vld [vmem:[%s74 + $0x18] sm:$0xff]
    %s79 = scalar_lea.vmem %s3, 64
    %v80 = vld [vmem:[%s79] sm:$0xff]
    %v81 = vld [vmem:[%s79 + $0x8] sm:$0xff]
    %v82 = vld [vmem:[%s79 + $0x10] sm:$0xff]
    %v83 = vld [vmem:[%s79 + $0x18] sm:$0xff]
    %v84 = vld [vmem:[%s4] sm:$0x1]
    %v86 = vlaneseq
    %v87 = vshrl.u32 %v86, 7
    %v88 = vsub.s32 0, %v87
    %v89 = vrot.slane %v84, %v88
    %v91 = vmul.f32 %v70, %v89
    %v92 = vmul.f32 %v71, %v89
    %v93 = vmul.f32 %v72, %v89
    %v94 = vmul.f32 %v73, %v89
    %s95 = scalar_lea.vmem %s4, 1
    %v96 = vld [vmem:[%s95] sm:$0x1]
    %v98 = vlaneseq
    %v99 = vshrl.u32 %v98, 7
    %v100 = vsub.s32 0, %v99
    %v101 = vrot.slane %v96, %v100
    %v103 = vmul.f32 %v75, %v101
    %v104 = vmul.f32 %v76, %v101
    %v105 = vmul.f32 %v77, %v101
    %v106 = vmul.f32 %v78, %v101
    %v107 = vadd.f32 %v91, %v103
    %v108 = vadd.f32 %v92, %v104
    %v109 = vadd.f32 %v93, %v105
    %v110 = vadd.f32 %v94, %v106
    %s111 = scalar_lea.vmem %s4, 2
    %v112 = vld [vmem:[%s111] sm:$0x1]
    %v114 = vlaneseq
    %v115 = vshrl.u32 %v114, 7
    %v116 = vsub.s32 0, %v115
    %v117 = vrot.slane %v112, %v116
    %v119 = vmul.f32 %v80, %v117
    %v120 = vmul.f32 %v81, %v117
    %v121 = vmul.f32 %v82, %v117
    %v122 = vmul.f32 %v83, %v117
    %v123 = vadd.f32 %v107, %v119
    %v124 = vadd.f32 %v108, %v120
    %v125 = vadd.f32 %v109, %v121
    %v126 = vadd.f32 %v110, %v122
    %127 = vrot.lane.b32.xlu0 %v123, 64
    %v128 = vpop.permute.xlu0 %127
    %129 = vrot.lane.b32.xlu0 %v124, 64
    %v130 = vpop.permute.xlu0 %129
    %131 = vrot.lane.b32.xlu0 %v125, 64
    %v132 = vpop.permute.xlu0 %131
    %133 = vrot.lane.b32.xlu0 %v126, 64
    %v134 = vpop.permute.xlu0 %133
    %v135 = vadd.f32 %v123, %v128
    %v136 = vadd.f32 %v124, %v130
    %v137 = vadd.f32 %v125, %v132
    %v138 = vadd.f32 %v126, %v134
    %v139 = vstv %s56
    %v140 = vadd.f32 %v135, %v139
    %v141 = vadd.f32 %v136, %v139
    %v142 = vadd.f32 %v137, %v139
    %v143 = vadd.f32 %v138, %v139
    %v144 = vmax.f32 %v140, 0.0
    %v145 = vmax.f32 %v141, 0.0
    %v146 = vmax.f32 %v142, 0.0
    %v147 = vmax.f32 %v143, 0.0
    %v148 = vstv %s62
    %v149 = vmul.f32 %v144, %v148
    %v150 = vmul.f32 %v145, %v148
    %v151 = vmul.f32 %v146, %v148
    %v152 = vmul.f32 %v147, %v148
    %v153 = vstv %s63
    %v154 = vmul.f32 %v144, %v153
    %v155 = vmul.f32 %v145, %v153
    %v156 = vmul.f32 %v146, %v153
    %v157 = vmul.f32 %v147, %v153
    %s158 = scalar_lea.vmem %s4, 3
    %v159 = vld [vmem:[%s158] sm:$0x1]
    %v161 = vlaneseq
    %v162 = vshrl.u32 %v161, 7
    %v163 = vsub.s32 0, %v162
    %v164 = vrot.slane %v159, %v163
    %v166 = vmul.f32 %v70, %v164
    %v167 = vmul.f32 %v71, %v164
    %v168 = vmul.f32 %v72, %v164
    %v169 = vmul.f32 %v73, %v164
    %s170 = scalar_lea.vmem %s4, 4
    %v171 = vld [vmem:[%s170] sm:$0x1]
    %v173 = vlaneseq
    %v174 = vshrl.u32 %v173, 7
    %v175 = vsub.s32 0, %v174
    %v176 = vrot.slane %v171, %v175
    %v178 = vmul.f32 %v75, %v176
    %v179 = vmul.f32 %v76, %v176
    %v180 = vmul.f32 %v77, %v176
    %v181 = vmul.f32 %v78, %v176
    %v182 = vadd.f32 %v166, %v178
    %v183 = vadd.f32 %v167, %v179
    %v184 = vadd.f32 %v168, %v180
    %v185 = vadd.f32 %v169, %v181
    %s186 = scalar_lea.vmem %s4, 5
    %v187 = vld [vmem:[%s186] sm:$0x1]
    %v189 = vlaneseq
    %v190 = vshrl.u32 %v189, 7
    %v191 = vsub.s32 0, %v190
    %v192 = vrot.slane %v187, %v191
    %v194 = vmul.f32 %v80, %v192
    %v195 = vmul.f32 %v81, %v192
    %v196 = vmul.f32 %v82, %v192
    %v197 = vmul.f32 %v83, %v192
    %v198 = vadd.f32 %v182, %v194
    %v199 = vadd.f32 %v183, %v195
    %v200 = vadd.f32 %v184, %v196
    %v201 = vadd.f32 %v185, %v197
    %202 = vrot.lane.b32.xlu0 %v198, 64
    %v203 = vpop.permute.xlu0 %202
    %204 = vrot.lane.b32.xlu0 %v199, 64
    %v205 = vpop.permute.xlu0 %204
    %206 = vrot.lane.b32.xlu0 %v200, 64
    %v207 = vpop.permute.xlu0 %206
    %208 = vrot.lane.b32.xlu0 %v201, 64
    %v209 = vpop.permute.xlu0 %208
    %v210 = vadd.f32 %v198, %v203
    %v211 = vadd.f32 %v199, %v205
    %v212 = vadd.f32 %v200, %v207
    %v213 = vadd.f32 %v201, %v209
    %v214 = vstv %s57
    %v215 = vadd.f32 %v210, %v214
    %v216 = vadd.f32 %v211, %v214
    %v217 = vadd.f32 %v212, %v214
    %v218 = vadd.f32 %v213, %v214
    %v219 = vmax.f32 %v215, 0.0
    %v220 = vmax.f32 %v216, 0.0
    %v221 = vmax.f32 %v217, 0.0
    %v222 = vmax.f32 %v218, 0.0
    %v223 = vstv %s64
    %v224 = vmul.f32 %v219, %v223
    %v225 = vmul.f32 %v220, %v223
    %v226 = vmul.f32 %v221, %v223
    %v227 = vmul.f32 %v222, %v223
    %v228 = vadd.f32 %v149, %v224
    %v229 = vadd.f32 %v150, %v225
    %v230 = vadd.f32 %v151, %v226
    %v231 = vadd.f32 %v152, %v227
    %v232 = vstv %s65
    %v233 = vmul.f32 %v219, %v232
    %v234 = vmul.f32 %v220, %v232
    %v235 = vmul.f32 %v221, %v232
    %v236 = vmul.f32 %v222, %v232
    %v237 = vadd.f32 %v154, %v233
    %v238 = vadd.f32 %v155, %v234
    %v239 = vadd.f32 %v156, %v235
    %v240 = vadd.f32 %v157, %v236
    %s241 = scalar_lea.vmem %s4, 6
    %v242 = vld [vmem:[%s241] sm:$0x1]
    %v244 = vlaneseq
    %v245 = vshrl.u32 %v244, 7
    %v246 = vsub.s32 0, %v245
    %v247 = vrot.slane %v242, %v246
    %v249 = vmul.f32 %v70, %v247
    %v250 = vmul.f32 %v71, %v247
    %v251 = vmul.f32 %v72, %v247
    %v252 = vmul.f32 %v73, %v247
    %s253 = scalar_lea.vmem %s4, 7
    %v254 = vld [vmem:[%s253] sm:$0x1]
    %v256 = vlaneseq
    %v257 = vshrl.u32 %v256, 7
    %v258 = vsub.s32 0, %v257
    %v259 = vrot.slane %v254, %v258
    %v261 = vmul.f32 %v75, %v259
    %v262 = vmul.f32 %v76, %v259
    %v263 = vmul.f32 %v77, %v259
    %v264 = vmul.f32 %v78, %v259
    %v265 = vadd.f32 %v249, %v261
    %v266 = vadd.f32 %v250, %v262
    %v267 = vadd.f32 %v251, %v263
    %v268 = vadd.f32 %v252, %v264
    %s269 = scalar_lea.vmem %s4, 8
    %v270 = vld [vmem:[%s269] sm:$0x1]
    %v272 = vlaneseq
    %v273 = vshrl.u32 %v272, 7
    %v274 = vsub.s32 0, %v273
    %v275 = vrot.slane %v270, %v274
    %v277 = vmul.f32 %v80, %v275
    %v278 = vmul.f32 %v81, %v275
    %v279 = vmul.f32 %v82, %v275
    %v280 = vmul.f32 %v83, %v275
    %v281 = vadd.f32 %v265, %v277
    %v282 = vadd.f32 %v266, %v278
    %v283 = vadd.f32 %v267, %v279
    %v284 = vadd.f32 %v268, %v280
    %285 = vrot.lane.b32.xlu0 %v281, 64
    %v286 = vpop.permute.xlu0 %285
    %287 = vrot.lane.b32.xlu0 %v282, 64
    %v288 = vpop.permute.xlu0 %287
    %289 = vrot.lane.b32.xlu0 %v283, 64
    %v290 = vpop.permute.xlu0 %289
    %291 = vrot.lane.b32.xlu0 %v284, 64
    %v292 = vpop.permute.xlu0 %291
    %v293 = vadd.f32 %v281, %v286
    %v294 = vadd.f32 %v282, %v288
    %v295 = vadd.f32 %v283, %v290
    %v296 = vadd.f32 %v284, %v292
    %v297 = vstv %s58
    %v298 = vadd.f32 %v293, %v297
    %v299 = vadd.f32 %v294, %v297
    %v300 = vadd.f32 %v295, %v297
    %v301 = vadd.f32 %v296, %v297
    %v302 = vmax.f32 %v298, 0.0
    %v303 = vmax.f32 %v299, 0.0
    %v304 = vmax.f32 %v300, 0.0
    %v305 = vmax.f32 %v301, 0.0
    %v306 = vstv %s66
    %v307 = vmul.f32 %v302, %v306
    %v308 = vmul.f32 %v303, %v306
    %v309 = vmul.f32 %v304, %v306
    %v310 = vmul.f32 %v305, %v306
    %v311 = vadd.f32 %v228, %v307
    %v312 = vadd.f32 %v229, %v308
    %v313 = vadd.f32 %v230, %v309
    %v314 = vadd.f32 %v231, %v310
    %v315 = vstv %s67
    %v316 = vmul.f32 %v302, %v315
    %v317 = vmul.f32 %v303, %v315
    %v318 = vmul.f32 %v304, %v315
    %v319 = vmul.f32 %v305, %v315
    %v320 = vadd.f32 %v237, %v316
    %v321 = vadd.f32 %v238, %v317
    %v322 = vadd.f32 %v239, %v318
    %v323 = vadd.f32 %v240, %v319
    %s324 = scalar_lea.vmem %s4, 9
    %v325 = vld [vmem:[%s324] sm:$0x1]
    %v327 = vlaneseq
    %v328 = vshrl.u32 %v327, 7
    %v329 = vsub.s32 0, %v328
    %v330 = vrot.slane %v325, %v329
    %v332 = vmul.f32 %v70, %v330
    %v333 = vmul.f32 %v71, %v330
    %v334 = vmul.f32 %v72, %v330
    %v335 = vmul.f32 %v73, %v330
    %s336 = scalar_lea.vmem %s4, 10
    %v337 = vld [vmem:[%s336] sm:$0x1]
    %v339 = vlaneseq
    %v340 = vshrl.u32 %v339, 7
    %v341 = vsub.s32 0, %v340
    %v342 = vrot.slane %v337, %v341
    %v344 = vmul.f32 %v75, %v342
    %v345 = vmul.f32 %v76, %v342
    %v346 = vmul.f32 %v77, %v342
    %v347 = vmul.f32 %v78, %v342
    %v348 = vadd.f32 %v332, %v344
    %v349 = vadd.f32 %v333, %v345
    %v350 = vadd.f32 %v334, %v346
    %v351 = vadd.f32 %v335, %v347
    %s352 = scalar_lea.vmem %s4, 11
    %v353 = vld [vmem:[%s352] sm:$0x1]
    %v355 = vlaneseq
    %v356 = vshrl.u32 %v355, 7
    %v357 = vsub.s32 0, %v356
    %v358 = vrot.slane %v353, %v357
    %v360 = vmul.f32 %v80, %v358
    %v361 = vmul.f32 %v81, %v358
    %v362 = vmul.f32 %v82, %v358
    %v363 = vmul.f32 %v83, %v358
    %v364 = vadd.f32 %v348, %v360
    %v365 = vadd.f32 %v349, %v361
    %v366 = vadd.f32 %v350, %v362
    %v367 = vadd.f32 %v351, %v363
    %368 = vrot.lane.b32.xlu0 %v364, 64
    %v369 = vpop.permute.xlu0 %368
    %370 = vrot.lane.b32.xlu0 %v365, 64
    %v371 = vpop.permute.xlu0 %370
    %372 = vrot.lane.b32.xlu0 %v366, 64
    %v373 = vpop.permute.xlu0 %372
    %374 = vrot.lane.b32.xlu0 %v367, 64
    %v375 = vpop.permute.xlu0 %374
    %v376 = vadd.f32 %v364, %v369
    %v377 = vadd.f32 %v365, %v371
    %v378 = vadd.f32 %v366, %v373
    %v379 = vadd.f32 %v367, %v375
    %v380 = vstv %s59
    %v381 = vadd.f32 %v376, %v380
    %v382 = vadd.f32 %v377, %v380
    %v383 = vadd.f32 %v378, %v380
    %v384 = vadd.f32 %v379, %v380
    %v385 = vmax.f32 %v381, 0.0
    %v386 = vmax.f32 %v382, 0.0
    %v387 = vmax.f32 %v383, 0.0
    %v388 = vmax.f32 %v384, 0.0
    %v389 = vstv %s68
    %v390 = vmul.f32 %v385, %v389
    %v391 = vmul.f32 %v386, %v389
    %v392 = vmul.f32 %v387, %v389
    %v393 = vmul.f32 %v388, %v389
    %v394 = vadd.f32 %v311, %v390
    %v395 = vadd.f32 %v312, %v391
    %v396 = vadd.f32 %v313, %v392
    %v397 = vadd.f32 %v314, %v393
    %v398 = vstv %s69
    %v399 = vmul.f32 %v385, %v398
    %v400 = vmul.f32 %v386, %v398
    %v401 = vmul.f32 %v387, %v398
    %v402 = vmul.f32 %v388, %v398
    %v403 = vadd.f32 %v320, %v399
    %v404 = vadd.f32 %v321, %v400
    %v405 = vadd.f32 %v322, %v401
    %v406 = vadd.f32 %v323, %v402
    %v407 = vlaneseq
    %v408 = vand.u32 %v407, 127
    %vm409 = vcmp.lt.s32.totalorder %v408, 64
    %v410 = vstv %s60
    %v411 = vadd.f32 %v394, %v410
    %v412 = vadd.f32 %v395, %v410
    %v413 = vadd.f32 %v396, %v410
    %v414 = vadd.f32 %v397, %v410
    %v415 = vstv %s61
    %v416 = vadd.f32 %v403, %v415
    %v417 = vadd.f32 %v404, %v415
    %v418 = vadd.f32 %v405, %v415
    %v419 = vadd.f32 %v406, %v415
    %v420 = vsel %vm409, %v411, %v416
    %v421 = vsel %vm409, %v412, %v417
    %v422 = vsel %vm409, %v413, %v418
    %v423 = vsel %vm409, %v414, %v419
    %424 = vst [vmem:[%s5] sm:$0xff] %v420
    %425 = vst [vmem:[%s5 + $0x8] sm:$0xff] %v421
    %426 = vst [vmem:[%s5 + $0x10] sm:$0xff] %v422
    %427 = vst [vmem:[%s5 + $0x18] sm:$0xff] %v423
    // Predicated region
    $region34: #{model_forward.1} parent=1 // pred_check
      _
    $region35: #{model_forward.1} parent=1 // pred_check_branch
      %429 = sbr.rel (0) target = $region37
    $region36: #{model_forward.1} parent=1 // pred_region
      _
    $region37: #{model_forward.1} parent=1 // pred_fallthru
      _
    // Predicated region
    $region38: #{model_forward.1} parent=1 // pred_check
      _
    $region39: #{model_forward.1} parent=1 // pred_check_branch
      %431 = sbr.rel (0) target = $region41
    $region40: #{model_forward.1} parent=1 // pred_region
      _
    $region41: #{model_forward.1} parent=1 // pred_fallthru
      _
    %432 = vsyncpa [#allocation3], 1
    %433 = vsyncpa [#allocation5], 1

</llo_original>
